<compile_context>
chip_gen: v7x
topology: tpu7x:2x2x1
jax: 0.10.0
libtpu: 0.0.40
codegen_flags: <defaults>
</compile_context>

<pallas_src>
import jax
import jax.numpy as jnp
from jax.experimental import pallas as pl
from jax.experimental.pallas import tpu as pltpu


# ---------------------------------------------------------------------------
# Pallas kernel: fused  tanh( relu(x @ W1 + b1) @ W2 + b2 )  for one row-tile
# ---------------------------------------------------------------------------
def _s2a_mlp_kernel(x_ref, w1_ref, b1_ref, w2_ref, b2_ref, o_ref):
    # Hoisted single reads (biases broadcast once; no inner loop in the body).
    b1 = b1_ref[...]                                           # (1, hidden)   f32
    b2 = b2_ref[...]                                           # (1, out_pad)  f32

    # Cast to the MXU compute dtype inside the kernel (x streams from HBM in
    # its native dtype; no extra wrapper-side cast pass over HBM).
    x = x_ref[...].astype(w1_ref.dtype)                        # (TB, in_dim)

    # First matmul on the MXU, f32 accumulate; epilogue in f32.
    h = jnp.dot(x, w1_ref[...], preferred_element_type=jnp.float32) + b1
    h = jnp.maximum(h, 0.0)                                    # ReLU (VPU, f32)

    # Second matmul: feed MXU in the compute dtype, accumulate in f32.
    y = jnp.dot(h.astype(w2_ref.dtype), w2_ref[...],
                preferred_element_type=jnp.float32) + b2
    o_ref[...] = jnp.tanh(y).astype(o_ref.dtype)               # Tanh head (EUP)


def _round_up(n, m):
    return -(-n // m) * m


def s2a_forward(x, params, *, block_rows=1024, compute_dtype=jnp.bfloat16):
    """Pallas-backed forward pass of S2AWrapper.

    Handles the 1-D input case exactly like the PyTorch module
    (unsqueeze(0) -> net -> squeeze(0)).
    """
    w1, b1, w2, b2 = params["w1"], params["b1"], params["w2"], params["b2"]

    squeeze = x.ndim == 1
    if squeeze:
        x = x[None, :]

    B, in_dim = x.shape
    hidden = w1.shape[1]
    out_dim = w2.shape[1]
    out_dtype = x.dtype

    # --- lane-dense output: zero-pad out_dim up to a multiple of 128 --------
    LANE = 128
    out_pad = _round_up(out_dim, LANE)
    if out_pad != out_dim:
        w2 = jnp.pad(w2, ((0, 0), (0, out_pad - out_dim)))
        b2 = jnp.pad(b2, ((0, 0), (0, out_pad - out_dim)))

    # --- batch tiling: TB rows per grid step, batch padded to a multiple ----
    # TB is a multiple of 8 (sublane tile).  Tiny batches (incl. the 1-D path)
    # all pad up to one 8-row tile, so they share a single compiled shape.
    TB = min(block_rows, _round_up(max(B, 8), 8))
    TB = _round_up(TB, 8)
    B_pad = _round_up(B, TB)
    if B_pad != B:
        x = jnp.pad(x, ((0, B_pad - B), (0, 0)))

    # --- dtype handling: bf16 weights, f32 accumulate + f32 epilogue --------
    # x keeps its native dtype (cast happens inside the kernel); weights are
    # tiny so a one-time wrapper cast is negligible.
    w1k = w1.astype(compute_dtype)
    w2k = w2.astype(compute_dtype)
    b1k = b1.astype(jnp.float32)
    b2k = b2.astype(jnp.float32)

    grid = (pl.cdiv(B_pad, TB),)

    cdt_size = jnp.dtype(compute_dtype).itemsize
    flops = 2 * B_pad * (in_dim * hidden + hidden * out_pad)
    bytes_accessed = (
        B_pad * in_dim * jnp.dtype(x.dtype).itemsize               # x stream
        + (in_dim * hidden + hidden * out_pad) * cdt_size          # weights
        + (hidden + out_pad) * 4                                   # biases (f32)
        + B_pad * out_pad * jnp.dtype(out_dtype).itemsize          # output
    )
    transcendentals = B_pad * out_pad                              # tanh

    out = pl.pallas_call(
        _s2a_mlp_kernel,
        out_shape=jax.ShapeDtypeStruct((B_pad, out_pad), out_dtype),
        grid=grid,
        in_specs=[
            pl.BlockSpec((TB, in_dim), lambda i: (i, 0)),        # x row-tile
            pl.BlockSpec((in_dim, hidden), lambda i: (0, 0)),    # W1 (pinned)
            pl.BlockSpec((1, hidden), lambda i: (0, 0)),         # b1 (pinned)
            pl.BlockSpec((hidden, out_pad), lambda i: (0, 0)),   # W2 (pinned)
            pl.BlockSpec((1, out_pad), lambda i: (0, 0)),        # b2 (pinned)
        ],
        out_specs=pl.BlockSpec((TB, out_pad), lambda i: (i, 0)),
        compiler_params=pltpu.CompilerParams(
            dimension_semantics=("parallel",),                   # v7x: 2 TCs
        ),
        cost_estimate=pl.CostEstimate(
            flops=flops,
            transcendentals=transcendentals,
            bytes_accessed=bytes_accessed,
        ),
    )(x, w1k, b1k, w2k, b2k)

    out = out[:B, :out_dim]
    if squeeze:
        out = out[0]
    return out


# ---------------------------------------------------------------------------
# Deterministic parameter init (mirrors nn.Linear default: U(-1/sqrt(fan_in), ..))
# ---------------------------------------------------------------------------
def init_params(key, in_dim, hidden, out_dim, dtype=jnp.float32):
    k1, k2, k3, k4 = jax.random.split(key, 4)
    lim1 = 1.0 / jnp.sqrt(in_dim)
    lim2 = 1.0 / jnp.sqrt(hidden)
    return {
        "w1": jax.random.uniform(k1, (in_dim, hidden), dtype, -lim1, lim1),
        "b1": jax.random.uniform(k2, (1, hidden), dtype, -lim1, lim1),
        "w2": jax.random.uniform(k3, (hidden, out_dim), dtype, -lim2, lim2),
        "b2": jax.random.uniform(k4, (1, out_dim), dtype, -lim2, lim2),
    }


def reference_forward(x, params):
    """Pure-JAX f32 reference of the same forward (for sanity check)."""
    squeeze = x.ndim == 1
    if squeeze:
        x = x[None, :]
    h = jnp.maximum(x @ params["w1"] + params["b1"], 0.0)
    y = jnp.tanh(h @ params["w2"] + params["b2"])
    return y[0] if squeeze else y


if __name__ == "__main__":
    # Concrete instantiation of the abstract S2AWrapper:
    #   in_dim=32, hidden=64, out_dim=16, tahn=True
    in_dim, hidden, out_dim = 32, 64, 16
    batch = 2

    key = jax.random.PRNGKey(0)
    pkey, xkey, vkey, lkey = jax.random.split(key, 4)
    params = init_params(pkey, in_dim, hidden, out_dim)

    # --- 2-D (batched) input path, f32 compute: exact check ----------------
    x2d = jax.random.normal(xkey, (batch, in_dim), dtype=jnp.float32)
    out2d_f32 = jax.block_until_ready(
        s2a_forward(x2d, params, compute_dtype=jnp.float32))
    ref2d = reference_forward(x2d, params)
    assert out2d_f32.shape == (batch, out_dim)
    assert jnp.allclose(out2d_f32, ref2d, atol=1e-5, rtol=1e-5)

    # --- 2-D input path, default bf16 operands / f32 accumulate ------------
    out2d_bf16 = jax.block_until_ready(s2a_forward(x2d, params))
    assert out2d_bf16.shape == (batch, out_dim)
    assert jnp.allclose(out2d_bf16, ref2d, atol=5e-2, rtol=5e-2)

    # --- 1-D input path (unsqueeze/squeeze behavior of S2AWrapper.forward) -
    x1d = jax.random.normal(vkey, (in_dim,), dtype=jnp.float32)
    out1d = jax.block_until_ready(s2a_forward(x1d, params))
    ref1d = reference_forward(x1d, params)
    assert out1d.shape == (out_dim,)
    assert jnp.allclose(out1d, ref1d, atol=5e-2, rtol=5e-2)

    # --- larger, non-tile-aligned batch: exercises the grid + padding path -
    xlg = jax.random.normal(lkey, (1000, in_dim), dtype=jnp.float32)
    outlg = jax.block_until_ready(s2a_forward(xlg, params))
    reflg = reference_forward(xlg, params)
    assert outlg.shape == (1000, out_dim)
    assert jnp.allclose(outlg, reflg, atol=5e-2, rtol=5e-2)

    print("KERNEL_OK")
</pallas_src>

<mosaic_0001>
module attributes {stable_mosaic.version = 11 : i64} {
  func.func @_s2a_mlp_kernel(%arg0: i32, %arg1: memref<8x32xf32, #tpu.memory_space<vmem>>, %arg2: memref<32x64xf32, #tpu.memory_space<vmem>>, %arg3: memref<1x64xf32, #tpu.memory_space<vmem>>, %arg4: memref<64x128xf32, #tpu.memory_space<vmem>>, %arg5: memref<1x128xf32, #tpu.memory_space<vmem>>, %arg6: memref<8x128xf32, #tpu.memory_space<vmem>>) attributes {dimension_semantics = [#tpu.dimension_semantics<parallel>], iteration_bounds = array<i64: 1>, scalar_prefetch = 0 : i64, scratch_operands = 0 : i64, tpu.core_type = #tpu.core_type<tc>, window_params = [{transform_indices = @transform_0, window_bounds = array<i64: 8, 32>}, {pipeline_mode = #tpu.pipeline_mode<synchronous>, transform_indices = @transform_1, window_bounds = array<i64: 32, 64>}, {pipeline_mode = #tpu.pipeline_mode<synchronous>, transform_indices = @transform_2, window_bounds = array<i64: 1, 64>}, {pipeline_mode = #tpu.pipeline_mode<synchronous>, transform_indices = @transform_3, window_bounds = array<i64: 64, 128>}, {pipeline_mode = #tpu.pipeline_mode<synchronous>, transform_indices = @transform_4, window_bounds = array<i64: 1, 128>}, {transform_indices = @transform_5, window_bounds = array<i64: 8, 128>}]} {
    %c0 = arith.constant 0 : index
    %c0_0 = arith.constant 0 : index
    %0 = vector.load %arg3[%c0, %c0_0] : memref<1x64xf32, #tpu.memory_space<vmem>>, vector<1x64xf32>
    %c0_1 = arith.constant 0 : index
    %c0_2 = arith.constant 0 : index
    %1 = vector.load %arg5[%c0_1, %c0_2] : memref<1x128xf32, #tpu.memory_space<vmem>>, vector<1x128xf32>
    %c0_3 = arith.constant 0 : index
    %c0_4 = arith.constant 0 : index
    %2 = vector.load %arg1[%c0_3, %c0_4] : memref<8x32xf32, #tpu.memory_space<vmem>>, vector<8x32xf32>
    %c0_5 = arith.constant 0 : index
    %c0_6 = arith.constant 0 : index
    %3 = vector.load %arg2[%c0_5, %c0_6] : memref<32x64xf32, #tpu.memory_space<vmem>>, vector<32x64xf32>
    %cst = arith.constant dense<0.000000e+00> : vector<8x64xf32>
    %4 = tpu.matmul %2, %3, %cst {dimension_numbers = #tpu.dot_dimension_numbers<[1], [0], [0], [1], [0, 0, 1, 1], [], []>} : vector<8x32xf32>, vector<32x64xf32>, vector<8x64xf32> -> vector<8x64xf32>
    %5 = vector.broadcast %0 : vector<1x64xf32> to vector<8x64xf32>
    %6 = arith.addf %4, %5 : vector<8x64xf32>
    %cst_7 = arith.constant 0.000000e+00 : f32
    %7 = vector.broadcast %cst_7 : f32 to vector<8x64xf32>
    %8 = arith.maximumf %6, %7 : vector<8x64xf32>
    %c0_8 = arith.constant 0 : index
    %c0_9 = arith.constant 0 : index
    %9 = vector.load %arg4[%c0_8, %c0_9] : memref<64x128xf32, #tpu.memory_space<vmem>>, vector<64x128xf32>
    %cst_10 = arith.constant dense<0.000000e+00> : vector<8x128xf32>
    %10 = tpu.matmul %8, %9, %cst_10 {dimension_numbers = #tpu.dot_dimension_numbers<[1], [0], [0], [1], [0, 0, 1, 1], [], []>} : vector<8x64xf32>, vector<64x128xf32>, vector<8x128xf32> -> vector<8x128xf32>
    %11 = vector.broadcast %1 : vector<1x128xf32> to vector<8x128xf32>
    %12 = arith.addf %10, %11 : vector<8x128xf32>
    %13 = math.tanh %12 : vector<8x128xf32>
    %c0_11 = arith.constant 0 : index
    %c0_12 = arith.constant 0 : index
    %14 = vector.load %arg6[%c0_11, %c0_12] : memref<8x128xf32, #tpu.memory_space<vmem>>, vector<8x128xf32>
    tpu.vector_store %arg6[%c0_11, %c0_12], %13 {strides = array<i32>} : memref<8x128xf32, #tpu.memory_space<vmem>>, vector<8x128xf32>,
    return
  }
  func.func @transform_0(%arg0: i32) -> (i32, i32) {
    %c0_i32 = arith.constant 0 : i32
    %c0_i32_0 = arith.constant 0 : i32
    return %arg0, %c0_i32 : i32, i32
  }
  func.func @transform_1(%arg0: i32) -> (i32, i32) {
    %c0_i32 = arith.constant 0 : i32
    %c0_i32_0 = arith.constant 0 : i32
    %c0_i32_1 = arith.constant 0 : i32
    return %c0_i32, %c0_i32_0 : i32, i32
  }
  func.func @transform_2(%arg0: i32) -> (i32, i32) {
    %c0_i32 = arith.constant 0 : i32
    %c0_i32_0 = arith.constant 0 : i32
    %c0_i32_1 = arith.constant 0 : i32
    return %c0_i32, %c0_i32_0 : i32, i32
  }
  func.func @transform_3(%arg0: i32) -> (i32, i32) {
    %c0_i32 = arith.constant 0 : i32
    %c0_i32_0 = arith.constant 0 : i32
    %c0_i32_1 = arith.constant 0 : i32
    return %c0_i32, %c0_i32_0 : i32, i32
  }
  func.func @transform_4(%arg0: i32) -> (i32, i32) {
    %c0_i32 = arith.constant 0 : i32
    %c0_i32_0 = arith.constant 0 : i32
    %c0_i32_1 = arith.constant 0 : i32
    return %c0_i32, %c0_i32_0 : i32, i32
  }
  func.func @transform_5(%arg0: i32) -> (i32, i32) {
    %c0_i32 = arith.constant 0 : i32
    %c0_i32_0 = arith.constant 0 : i32
    return %arg0, %c0_i32 : i32, i32
  }
}

</mosaic_0001>

<llo_original>
// kernel: tpu_custom_call.1
$region0: #{tpu_custom_call.1}
  #allocation0 [shape = 'u32[]', space=smem, size = 0x4, offset = 0x4, fixed_abs, tag = 'smem constant byte address 0x4 - core index']
  #allocation1 [shape = 'u32[144,128]{1,0:T(1,128)}', space=vmem, size = 0x12000, scoped, tag = 'internal scratch']
  %s0 = inlined_call_operand.hbm [shape: f32[8,32], index: 0, kind: input, shape index: {}]
  %s1 = inlined_call_operand.hbm [shape: f32[32,64], index: 1, kind: input, shape index: {}]
  %s2 = inlined_call_operand.vmem [shape: f32[1,64], index: 2, kind: input, shape index: {}]
  %s3 = inlined_call_operand.hbm [shape: f32[64,128], index: 3, kind: input, shape index: {}]
  %s4 = inlined_call_operand.vmem [shape: f32[1,128], index: 4, kind: input, shape index: {}]
  %s5 = inlined_call_operand.hbm [shape: f32[8,128], index: 5, kind: output, shape index: {}]
  %s6 = sld [smem:[#allocation0]]
  $region42: #{tpu_custom_call.1} parent=0
    _
  %s8 = ssub.s32 1, %s6
  %s9 = scalar_select 0, %s8, %s6
  $region1: #{tpu_custom_call.1} parent=0
    #allocation2 [shape = 'u8[4096]{0}', space=vmem, size = 0x1000, scoped, tag = 'input window, operand 0, single buffered']
    #allocation3 [shape = 's32[1]{0}', space=sflag, size = 0x4, scoped, tag = 'scoped memory for tpu_custom_call.1']
    #allocation4 [shape = 's32[1]{0}', space=sflag, size = 0x4, scoped, tag = 'scoped memory for tpu_custom_call.1']
    #allocation5 [shape = 'u8[16384]{0}', space=vmem, size = 0x4000, scoped, tag = 'input window, operand 1, single buffered']
    #allocation6 [shape = 's32[1]{0}', space=sflag, size = 0x4, scoped, tag = 'scoped memory for tpu_custom_call.1']
    #allocation7 [shape = 'u8[32768]{0}', space=vmem, size = 0x8000, scoped, tag = 'input window, operand 3, single buffered']
    #allocation8 [shape = 'u8[4096]{0}', space=vmem, size = 0x1000, scoped, tag = 'output window, operand 0, single buffered']
    %10 = vsyncpa [#allocation3], 0
    %11 = vsyncpa [#allocation6], 0
    %12 = vsyncpa [#allocation4], 0
    // Predicated region
    $region2: #{tpu_custom_call.1} parent=1 // pred_check
      _
    $region3: #{tpu_custom_call.1} parent=1 // pred_check_branch
      %14 = sbr.rel (0) target = $region5
    $region4: #{tpu_custom_call.1} parent=1 // pred_region
      %s16 = ssub.s32 128, 128
      %17 = vsyncadd [#allocation3], %s16
      %s19 = sshll.u32 [#allocation2], 4
      %s20 = int_to_ptr.vmem [resolvable:$true] %s19
      %22 = dma.hbm_to_vmem [thread:$0]  %s0, 128, %s20, [#allocation3]
    $region5: #{tpu_custom_call.1} parent=1 // pred_fallthru
      _
    // Predicated region
    $region6: #{tpu_custom_call.1} parent=1 // pred_check
      _
    $region7: #{tpu_custom_call.1} parent=1 // pred_check_branch
      %24 = sbr.rel (0) target = $region9
    $region8: #{tpu_custom_call.1} parent=1 // pred_region
      %s26 = ssub.s32 512, 512
      %27 = vsyncadd [#allocation6], %s26
      %s28 = sshll.u32 [#allocation5], 4
      %s29 = int_to_ptr.vmem [resolvable:$true] %s28
      %34 = dma.hbm_to_vmem [thread:$0]  %s1, 512, %s29, [#allocation6], 128, 128, 8
    $region9: #{tpu_custom_call.1} parent=1 // pred_fallthru
      _
    // Predicated region
    $region10: #{tpu_custom_call.1} parent=1 // pred_check
      _
    $region11: #{tpu_custom_call.1} parent=1 // pred_check_branch
      %36 = sbr.rel (0) target = $region13
    $region12: #{tpu_custom_call.1} parent=1 // pred_region
      _
    $region13: #{tpu_custom_call.1} parent=1 // pred_fallthru
      _
    // Predicated region
    $region14: #{tpu_custom_call.1} parent=1 // pred_check
      _
    $region15: #{tpu_custom_call.1} parent=1 // pred_check_branch
      %38 = sbr.rel (0) target = $region17
    $region16: #{tpu_custom_call.1} parent=1 // pred_region
      %s40 = ssub.s32 1024, 1024
      %41 = vsyncadd [#allocation6], %s40
      %s42 = sshll.u32 [#allocation7], 4
      %s43 = int_to_ptr.vmem [resolvable:$true] %s42
      %48 = dma.hbm_to_vmem [thread:$0]  %s3, 1024, %s43, [#allocation6], 128, 128, 8
    $region17: #{tpu_custom_call.1} parent=1 // pred_fallthru
      _
    // Predicated region
    $region18: #{tpu_custom_call.1} parent=1 // pred_check
      _
    $region19: #{tpu_custom_call.1} parent=1 // pred_check_branch
      %50 = sbr.rel (0) target = $region21
    $region20: #{tpu_custom_call.1} parent=1 // pred_region
      _
    $region21: #{tpu_custom_call.1} parent=1 // pred_fallthru
      _
    // Predicated region
    $region22: #{tpu_custom_call.1} parent=1 // pred_check
      _
    $region23: #{tpu_custom_call.1} parent=1 // pred_check_branch
      %52 = sbr.rel (0) target = $region25
    $region24: #{tpu_custom_call.1} parent=1 // pred_region
      %53 = dma.done [#allocation3], 128
    $region25: #{tpu_custom_call.1} parent=1 // pred_fallthru
      _
    // Predicated region
    $region26: #{tpu_custom_call.1} parent=1 // pred_check
      _
    $region27: #{tpu_custom_call.1} parent=1 // pred_check_branch
      %55 = sbr.rel (0) target = $region29
    $region28: #{tpu_custom_call.1} parent=1 // pred_region
      %56 = dma.done [#allocation6], 512
    $region29: #{tpu_custom_call.1} parent=1 // pred_fallthru
      _
    // Predicated region
    $region30: #{tpu_custom_call.1} parent=1 // pred_check
      _
    $region31: #{tpu_custom_call.1} parent=1 // pred_check_branch
      %58 = sbr.rel (0) target = $region33
    $region32: #{tpu_custom_call.1} parent=1 // pred_region
      %59 = dma.done [#allocation6], 1024
    $region33: #{tpu_custom_call.1} parent=1 // pred_fallthru
      _
    %v60 = vld [vmem:[%s2] sm:$0x1]
    %v61 = vld [vmem:[%s4] sm:$0x1]
    %v62 = vld [vmem:[#allocation2] sm:$0xff]
    %v63 = vld [vmem:[#allocation5] sm:$0xff]
    %v64 = vld [vmem:[#allocation5 + $0x8] sm:$0xff]
    %v65 = vld [vmem:[#allocation5 + $0x10] sm:$0xff]
    %v66 = vld [vmem:[#allocation5 + $0x18] sm:$0xff]
    %v68 = vlaneseq
    %v69 = vshrl.u32 %v68, 7
    %v70 = vsub.s32 0, %v69
    %v71 = vrot.slane %v60, %v70
    %vm73 = vcmask 261120
    %v75 = vsel %vm73, %v62, 0
    %77 = vmatprep.subr.mxu0 0.0
    %78 = vmatpush1.msra.mxu0 %v63
    %79 = vmatprep.subr.mxu0 0.0
    %80 = vmatpush1.msra.mxu0 %v64
    %81 = vmatprep.subr.mxu0 0.0
    %82 = vmatpush1.msra.mxu0 %v65
    %83 = vmatprep.subr.mxu0 0.0
    %84 = vmatpush1.msra.mxu0 %v66
    %85 = vmatprep.subr.mxu0 0.0
    %86 = vmatpush1.msra.mxu0 0.0
    %87 = vmatprep.subr.mxu0 0.0
    %88 = vmatpush1.msra.mxu0 0.0
    %89 = vmatprep.subr.mxu0 0.0
    %90 = vmatpush1.msra.mxu0 0.0
    %91 = vmatprep.subr.mxu0 0.0
    %92 = vmatpush1.msra.mxu0 0.0
    %93 = vmatprep.subr.mxu0 0.0
    %94 = vmatpush1.msra.mxu0 0.0
    %95 = vmatprep.subr.mxu0 0.0
    %96 = vmatpush1.msra.mxu0 0.0
    %97 = vmatprep.subr.mxu0 0.0
    %98 = vmatpush1.msra.mxu0 0.0
    %99 = vmatprep.subr.mxu0 0.0
    %100 = vmatpush1.msra.mxu0 0.0
    %101 = vmatprep.subr.mxu0 0.0
    %102 = vmatpush1.msra.mxu0 0.0
    %103 = vmatprep.subr.mxu0 0.0
    %104 = vmatpush1.msra.mxu0 0.0
    %105 = vmatprep.subr.mxu0 0.0
    %106 = vmatpush1.msra.mxu0 0.0
    %107 = vmatprep.subr.mxu0 0.0
    %108 = vmatpush1.msra.mxu0 0.0
    %109 = vmatprep.subr.mxu0 0.0
    %110 = vmatpush1.msra.mxu0 0.0
    %111 = vmatprep.subr.mxu0 0.0
    %112 = vmatpush1.msra.mxu0 0.0
    %113 = vmatprep.subr.mxu0 0.0
    %114 = vmatpush1.msra.mxu0 0.0
    %115 = vmatprep.subr.mxu0 0.0
    %116 = vmatpush1.msra.mxu0 0.0
    %117 = vmatprep.subr.mxu0 0.0
    %118 = vmatpush1.msra.mxu0 0.0
    %119 = vmatprep.subr.mxu0 0.0
    %120 = vmatpush1.msra.mxu0 0.0
    %121 = vmatprep.subr.mxu0 0.0
    %122 = vmatpush1.msra.mxu0 0.0
    %123 = vmatprep.subr.mxu0 0.0
    %124 = vmatpush1.msra.mxu0 0.0
    %125 = vmatprep.subr.mxu0 0.0
    %126 = vmatpush1.msra.mxu0 0.0
    %127 = vmatprep.subr.mxu0 0.0
    %128 = vmatpush1.msra.mxu0 0.0
    %129 = vmatprep.subr.mxu0 0.0
    %130 = vmatpush1.msra.mxu0 0.0
    %131 = vmatprep.subr.mxu0 0.0
    %132 = vmatpush1.msra.mxu0 0.0
    %133 = vmatprep.subr.mxu0 0.0
    %134 = vmatpush1.msra.mxu0 0.0
    %135 = vmatprep.subr.mxu0 0.0
    %136 = vmatpush1.msra.mxu0 0.0
    %137 = vmatprep.subr.mxu0 0.0
    %138 = vmatpush1.msra.mxu0 0.0
    %139 = vmatprep.subr.mxu0 0.0
    %140 = vmatpush1.msra.mxu0 0.0
    %141 = vmatprep.mubr.f32.mxu0 0.0
    %142 = vmatmul.mubr.f32.gmra.mrb[0].mxu0 %v75
    %v143 = vpop.f32.mrb[0].mxu0
    %v144 = vadd.f32 %v71, %v143
    %v145 = vpop.f32.mrb[0].mxu0
    %146 = vdwg.mxu0
    %v147 = vmax.f32 %v144, 0.0
    %v148 = vld [vmem:[#allocation7] sm:$0xff]
    %v149 = vld [vmem:[#allocation7 + $0x8] sm:$0xff]
    %v150 = vld [vmem:[#allocation7 + $0x10] sm:$0xff]
    %v151 = vld [vmem:[#allocation7 + $0x18] sm:$0xff]
    %v152 = vld [vmem:[#allocation7 + $0x20] sm:$0xff]
    %v153 = vld [vmem:[#allocation7 + $0x28] sm:$0xff]
    %v154 = vld [vmem:[#allocation7 + $0x30] sm:$0xff]
    %v155 = vld [vmem:[#allocation7 + $0x38] sm:$0xff]
    %v157 = vlaneseq
    %v158 = vshrl.u32 %v157, 7
    %v159 = vsub.s32 0, %v158
    %v160 = vrot.slane %v61, %v159
    %vm162 = vcmask 523264
    %v164 = vsel %vm162, %v147, 0
    %166 = vmatprep.subr.mxu0 0.0
    %167 = vmatpush1.msra.mxu0 %v148
    %168 = vmatprep.subr.mxu0 0.0
    %169 = vmatpush1.msra.mxu0 %v149
    %170 = vmatprep.subr.mxu0 0.0
    %171 = vmatpush1.msra.mxu0 %v150
    %172 = vmatprep.subr.mxu0 0.0
    %173 = vmatpush1.msra.mxu0 %v151
    %174 = vmatprep.subr.mxu0 0.0
    %175 = vmatpush1.msra.mxu0 %v152
    %176 = vmatprep.subr.mxu0 0.0
    %177 = vmatpush1.msra.mxu0 %v153
    %178 = vmatprep.subr.mxu0 0.0
    %179 = vmatpush1.msra.mxu0 %v154
    %180 = vmatprep.subr.mxu0 0.0
    %181 = vmatpush1.msra.mxu0 %v155
    %182 = vmatprep.subr.mxu0 0.0
    %183 = vmatpush1.msra.mxu0 0.0
    %184 = vmatprep.subr.mxu0 0.0
    %185 = vmatpush1.msra.mxu0 0.0
    %186 = vmatprep.subr.mxu0 0.0
    %187 = vmatpush1.msra.mxu0 0.0
    %188 = vmatprep.subr.mxu0 0.0
    %189 = vmatpush1.msra.mxu0 0.0
    %190 = vmatprep.subr.mxu0 0.0
    %191 = vmatpush1.msra.mxu0 0.0
    %192 = vmatprep.subr.mxu0 0.0
    %193 = vmatpush1.msra.mxu0 0.0
    %194 = vmatprep.subr.mxu0 0.0
    %195 = vmatpush1.msra.mxu0 0.0
    %196 = vmatprep.subr.mxu0 0.0
    %197 = vmatpush1.msra.mxu0 0.0
    %198 = vmatprep.subr.mxu0 0.0
    %199 = vmatpush1.msra.mxu0 0.0
    %200 = vmatprep.subr.mxu0 0.0
    %201 = vmatpush1.msra.mxu0 0.0
    %202 = vmatprep.subr.mxu0 0.0
    %203 = vmatpush1.msra.mxu0 0.0
    %204 = vmatprep.subr.mxu0 0.0
    %205 = vmatpush1.msra.mxu0 0.0
    %206 = vmatprep.subr.mxu0 0.0
    %207 = vmatpush1.msra.mxu0 0.0
    %208 = vmatprep.subr.mxu0 0.0
    %209 = vmatpush1.msra.mxu0 0.0
    %210 = vmatprep.subr.mxu0 0.0
    %211 = vmatpush1.msra.mxu0 0.0
    %212 = vmatprep.subr.mxu0 0.0
    %213 = vmatpush1.msra.mxu0 0.0
    %214 = vmatprep.subr.mxu0 0.0
    %215 = vmatpush1.msra.mxu0 0.0
    %216 = vmatprep.subr.mxu0 0.0
    %217 = vmatpush1.msra.mxu0 0.0
    %218 = vmatprep.subr.mxu0 0.0
    %219 = vmatpush1.msra.mxu0 0.0
    %220 = vmatprep.subr.mxu0 0.0
    %221 = vmatpush1.msra.mxu0 0.0
    %222 = vmatprep.subr.mxu0 0.0
    %223 = vmatpush1.msra.mxu0 0.0
    %224 = vmatprep.subr.mxu0 0.0
    %225 = vmatpush1.msra.mxu0 0.0
    %226 = vmatprep.subr.mxu0 0.0
    %227 = vmatpush1.msra.mxu0 0.0
    %228 = vmatprep.subr.mxu0 0.0
    %229 = vmatpush1.msra.mxu0 0.0
    %230 = vmatprep.mubr.f32.mxu0 0.0
    %231 = vmatmul.mubr.f32.gmra.mrb[0].mxu0 %v164
    %v232 = vpop.f32.mrb[0].mxu0
    %v233 = vadd.f32 %v160, %v232
    %v234 = vpop.f32.mrb[0].mxu0
    %235 = vdwg.mxu0
    %v236 = vtanh.pop %v233
    %237 = vst [vmem:[#allocation8] sm:$0xff] %v236
    // Predicated region
    $region34: #{tpu_custom_call.1} parent=1 // pred_check
      _
    $region35: #{tpu_custom_call.1} parent=1 // pred_check_branch
      %239 = sbr.rel (0) target = $region37
    $region36: #{tpu_custom_call.1} parent=1 // pred_region
      %s241 = ssub.s32 128, 128
      %242 = vsyncadd [#allocation4], %s241
      %s244 = sshll.u32 [#allocation8], 4
      %s245 = int_to_ptr.vmem [resolvable:$true] %s244
      %247 = dma.vmem_to_hbm [thread:$0]  %s245, 128, %s5, [#allocation4]
    $region37: #{tpu_custom_call.1} parent=1 // pred_fallthru
      _
    // Predicated region
    $region38: #{tpu_custom_call.1} parent=1 // pred_check
      _
    $region39: #{tpu_custom_call.1} parent=1 // pred_check_branch
      %249 = sbr.rel (0) target = $region41
    $region40: #{tpu_custom_call.1} parent=1 // pred_region
      %250 = dma.done [#allocation4], 128
    $region41: #{tpu_custom_call.1} parent=1 // pred_fallthru
      _
    %251 = vsyncpa [#allocation3], 1
    %252 = vsyncpa [#allocation6], 1
    %253 = vsyncpa [#allocation4], 1

</llo_original>
